<compile_context>
chip_gen: v5e
topology: v5e:2x2
jax: 0.10.0
libtpu: 0.0.40
codegen_flags: <defaults>
</compile_context>

<pallas_src>
import functools
import itertools

import jax
import jax.numpy as jnp
import numpy as np
from jax import lax
from jax.experimental import pallas as pl
from jax.experimental.pallas import tpu as pltpu


def _round_up(a, b):
    return (a + b - 1) // b * b


def _conv_bn_lrelu_kernel(xa_ref, xb_ref, w_ref, scale_ref, bias_ref, o_ref, *, offs, ts):
    # xa_ref: (C_in, TS)  bf16  current spatial tile of the flattened padded grid
    # xb_ref: (C_in, TS)  bf16  next spatial tile (halo source)
    # w_ref : (K, C_out, C_in) bf16  folded conv weights, K = 9 (2D) / 27 (3D)
    # scale_ref, bias_ref: (C_out, 1) f32  folded eval-mode BN affine
    # o_ref : (C_out, TS) f32   (lane-dense: TS >= 512 on lanes)
    x2 = jnp.concatenate([xa_ref[...], xb_ref[...]], axis=-1)       # (C_in, 2*TS)
    acc = jnp.zeros(o_ref.shape, jnp.float32)
    for k, off in enumerate(offs):                                   # static unroll
        tap = x2[:, off:off + ts]                                    # (C_in, TS) bf16
        acc = acc + jnp.dot(w_ref[k], tap, preferred_element_type=jnp.float32)
    y = acc * scale_ref[...] + bias_ref[...]
    o_ref[...] = jnp.where(y > 0.0, y, 0.01 * y).astype(o_ref.dtype)


@functools.partial(jax.jit, static_argnames=("ts",))
def conv_bn_lrelu(x, weight, gamma, beta, running_mean, running_var, eps=1e-5, ts=512):
    """Fused ConvNd(k=3, s=1, p=1, no bias) + BN(eval) + LeakyReLU(0.01).

    x: [N, C_in, *spatial] (NCHW or NCDHW); weight: [C_out, C_in, 3, 3(, 3)].
    Returns [N, C_out, *spatial] in float32.
    """
    n, c_in = x.shape[:2]
    spatial = x.shape[2:]
    nd = len(spatial)
    assert weight.shape[1] == c_in and weight.shape[2:] == (3,) * nd
    c_out = weight.shape[0]

    c_in_p = _round_up(c_in, 8)     # clean sublane layout for taps / weight
    c_out_p = _round_up(c_out, 8)   # clean sublane layout for the output tile

    padded = tuple(s + 2 for s in spatial)
    s_flat = 1
    for p in padded:
        s_flat *= p
    # Row strides of the flattened padded spatial grid and the tap offsets.
    strides = [1] * nd
    for i in range(nd - 2, -1, -1):
        strides[i] = strides[i + 1] * padded[i + 1]
    offs = tuple(sum(k[i] * strides[i] for i in range(nd))
                 for k in itertools.product(range(3), repeat=nd))
    halo = offs[-1]                                   # max tap offset

    ts = max(ts, _round_up(halo, 128))                # need halo <= TS, TS % 128 == 0
    s_pad = _round_up(s_flat, ts)
    num_tiles = s_pad // ts

    # Pad channels to a multiple of 8, pad spatial dims by 1 (conv zero padding),
    # flatten spatial, pad the flat axis by one extra tile so the "next tile" halo
    # block always exists.  One fused XLA pad pass, no transposes, bf16 for DMA/MXU.
    x_bf = x.astype(jnp.bfloat16)
    x_p = jnp.pad(x_bf, ((0, 0), (0, c_in_p - c_in)) + ((1, 1),) * nd)
    x_flat = x_p.reshape(n, c_in_p, s_flat)
    x_flat = jnp.pad(x_flat, ((0, 0), (0, 0), (0, s_pad + ts - s_flat)))

    # weight[o, c, *k] -> w_packed[k_flat, o, c]   (k_flat order matches `offs`).
    perm = tuple(range(2, 2 + nd)) + (0, 1)
    w_packed = jnp.transpose(weight, perm).reshape(3 ** nd, c_out, c_in)
    w_packed = jnp.pad(w_packed, ((0, 0), (0, c_out_p - c_out), (0, c_in_p - c_in)))
    w_packed = w_packed.astype(jnp.bfloat16)

    # Fold eval-mode BN into per-channel scale / bias (f32, applied to the f32 acc).
    inv_std = 1.0 / jnp.sqrt(running_var.astype(jnp.float32) + eps)
    scale_v = gamma.astype(jnp.float32) * inv_std
    bias_v = beta.astype(jnp.float32) - running_mean.astype(jnp.float32) * scale_v
    scale = jnp.pad(scale_v, (0, c_out_p - c_out)).reshape(c_out_p, 1)
    bias = jnp.pad(bias_v, (0, c_out_p - c_out)).reshape(c_out_p, 1)

    kernel = functools.partial(_conv_bn_lrelu_kernel, offs=offs, ts=ts)

    flops = 2 * n * s_pad * len(offs) * c_in_p * c_out_p
    bytes_accessed = 2 * x_flat.size * 2 + n * c_out_p * s_pad * 4 + w_packed.size * 2

    out_flat = pl.pallas_call(
        kernel,
        out_shape=jax.ShapeDtypeStruct((n, c_out_p, s_pad), jnp.float32),
        grid_spec=pltpu.PrefetchScalarGridSpec(
            num_scalar_prefetch=0,
            grid=(n, num_tiles),
            in_specs=[
                pl.BlockSpec((None, c_in_p, ts), lambda b, i: (b, 0, i)),
                pl.BlockSpec((None, c_in_p, ts), lambda b, i: (b, 0, i + 1)),
                pl.BlockSpec((3 ** nd, c_out_p, c_in_p), lambda b, i: (0, 0, 0)),
                pl.BlockSpec((c_out_p, 1), lambda b, i: (0, 0)),
                pl.BlockSpec((c_out_p, 1), lambda b, i: (0, 0)),
            ],
            out_specs=pl.BlockSpec((None, c_out_p, ts), lambda b, i: (b, 0, i)),
        ),
        compiler_params=pltpu.CompilerParams(
            dimension_semantics=("parallel", "parallel"),
        ),
        cost_estimate=pl.CostEstimate(
            flops=flops, transcendentals=0, bytes_accessed=bytes_accessed),
    )(x_flat, x_flat, w_packed, scale, bias)

    # Crop the padded flat grid / padded channels back to the valid NC(D)HW output.
    out = out_flat[:, :c_out, :s_flat].reshape((n, c_out) + padded)
    crop = (slice(None), slice(None)) + tuple(slice(0, s) for s in spatial)
    return out[crop]


def _reference_nd(x, weight, gamma, beta, running_mean, running_var, eps=1e-5):
    """Pure-JAX reference: convNd (pad=1) + eval BN + LeakyReLU(0.01)."""
    nd = x.ndim - 2
    dn = ("NCHW", "OIHW", "NCHW") if nd == 2 else ("NCDHW", "OIDHW", "NCDHW")
    y = lax.conv_general_dilated(
        x, weight, window_strides=(1,) * nd, padding=((1, 1),) * nd,
        dimension_numbers=dn)
    scale = gamma / jnp.sqrt(running_var + eps)
    bias = beta - running_mean * scale
    shape = (1, -1) + (1,) * nd
    y = y * scale.reshape(shape) + bias.reshape(shape)
    return jnp.where(y > 0, y, 0.01 * y)


def _check(out, x, w, g, b, m, v):
    # Tight check against a reference using bf16-rounded operands (verifies the kernel's
    # indexing / fusion exactly) + loose check against the fp32 module semantics
    # (bf16 MXU operands => ~1e-2 relative error expected).
    ref_bf16 = _reference_nd(x.astype(jnp.bfloat16).astype(jnp.float32),
                             w.astype(jnp.bfloat16).astype(jnp.float32), g, b, m, v)
    ref_f32 = _reference_nd(x, w, g, b, m, v)
    np.testing.assert_allclose(np.asarray(out), np.asarray(ref_bf16), rtol=1e-3, atol=1e-3)
    np.testing.assert_allclose(np.asarray(out), np.asarray(ref_f32), rtol=5e-2, atol=5e-2)


if __name__ == "__main__":
    key = jax.random.PRNGKey(0)
    keys = jax.random.split(key, 12)

    # ---- 2D ConvBnReLU (feature-net style layer) ----
    N, C_IN, C_OUT, H, W = 2, 4, 8, 16, 16
    x2d = jax.random.normal(keys[0], (N, C_IN, H, W), dtype=jnp.float32)
    w2d = jax.random.normal(keys[1], (C_OUT, C_IN, 3, 3), dtype=jnp.float32) * 0.1
    g2d = 1.0 + 0.1 * jax.random.normal(keys[2], (C_OUT,), dtype=jnp.float32)
    b2d = 0.1 * jax.random.normal(keys[3], (C_OUT,), dtype=jnp.float32)
    m2d = 0.1 * jax.random.normal(keys[4], (C_OUT,), dtype=jnp.float32)
    v2d = 1.0 + 0.1 * jax.random.uniform(keys[5], (C_OUT,), dtype=jnp.float32)

    out2d = jax.block_until_ready(conv_bn_lrelu(x2d, w2d, g2d, b2d, m2d, v2d))
    assert out2d.shape == (N, C_OUT, H, W), out2d.shape
    _check(out2d, x2d, w2d, g2d, b2d, m2d, v2d)

    # ---- 3D ConvBnReLU3D (CostRegNet conv0: G=8 cost-volume channels -> 8) ----
    N3, C3_IN, C3_OUT, D3, H3, W3 = 1, 8, 8, 8, 16, 16
    x3d = jax.random.normal(keys[6], (N3, C3_IN, D3, H3, W3), dtype=jnp.float32)
    w3d = jax.random.normal(keys[7], (C3_OUT, C3_IN, 3, 3, 3), dtype=jnp.float32) * 0.1
    g3d = 1.0 + 0.1 * jax.random.normal(keys[8], (C3_OUT,), dtype=jnp.float32)
    b3d = 0.1 * jax.random.normal(keys[9], (C3_OUT,), dtype=jnp.float32)
    m3d = 0.1 * jax.random.normal(keys[10], (C3_OUT,), dtype=jnp.float32)
    v3d = 1.0 + 0.1 * jax.random.uniform(keys[11], (C3_OUT,), dtype=jnp.float32)

    out3d = jax.block_until_ready(conv_bn_lrelu(x3d, w3d, g3d, b3d, m3d, v3d))
    assert out3d.shape == (N3, C3_OUT, D3, H3, W3), out3d.shape
    _check(out3d, x3d, w3d, g3d, b3d, m3d, v3d)

    print("KERNEL_OK")
</pallas_src>

<mosaic_0001>
module attributes {stable_mosaic.version = 11 : i64} {
  func.func @_conv_bn_lrelu_kernel(%arg0: i32, %arg1: i32, %arg2: memref<1x8x512xbf16, #tpu.memory_space<vmem>>, %arg3: memref<1x8x512xbf16, #tpu.memory_space<vmem>>, %arg4: memref<9x8x8xbf16, #tpu.memory_space<vmem>>, %arg5: memref<8x1xf32, #tpu.memory_space<vmem>>, %arg6: memref<8x1xf32, #tpu.memory_space<vmem>>, %arg7: memref<1x8x512xf32, #tpu.memory_space<vmem>>) attributes {dimension_semantics = [#tpu.dimension_semantics<parallel>, #tpu.dimension_semantics<parallel>], iteration_bounds = array<i64: 2, 1>, scalar_prefetch = 0 : i64, scratch_operands = 0 : i64, tpu.core_type = #tpu.core_type<tc>, window_params = [{transform_indices = @transform_0, window_bounds = array<i64: 1, 8, 512>}, {transform_indices = @transform_1, window_bounds = array<i64: 1, 8, 512>}, {pipeline_mode = #tpu.pipeline_mode<synchronous>, transform_indices = @transform_2, window_bounds = array<i64: 9, 8, 8>}, {pipeline_mode = #tpu.pipeline_mode<synchronous>, transform_indices = @transform_3, window_bounds = array<i64: 8, 1>}, {pipeline_mode = #tpu.pipeline_mode<synchronous>, transform_indices = @transform_4, window_bounds = array<i64: 8, 1>}, {transform_indices = @transform_5, window_bounds = array<i64: 1, 8, 512>}]} {
    %c0 = arith.constant 0 : index
    %c0_0 = arith.constant 0 : index
    %c0_1 = arith.constant 0 : index
    %0 = vector.load %arg2[%c0, %c0_0, %c0_1] : memref<1x8x512xbf16, #tpu.memory_space<vmem>>, vector<1x8x512xbf16>
    %1 = vector.shape_cast %0 : vector<1x8x512xbf16> to vector<8x512xbf16>
    %c0_2 = arith.constant 0 : index
    %c0_3 = arith.constant 0 : index
    %c0_4 = arith.constant 0 : index
    %2 = vector.load %arg3[%c0_2, %c0_3, %c0_4] : memref<1x8x512xbf16, #tpu.memory_space<vmem>>, vector<1x8x512xbf16>
    %3 = vector.shape_cast %2 : vector<1x8x512xbf16> to vector<8x512xbf16>
    %4 = tpu.concatenate %1, %3 in 1 : vector<8x512xbf16>, vector<8x512xbf16> -> vector<8x1024xbf16>
    %cst = arith.constant 0.000000e+00 : f32
    %5 = vector.broadcast %cst : f32 to vector<8x512xf32>
    %6 = vector.extract_strided_slice %4 {offsets = [0, 0], sizes = [8, 512], strides = [1, 1]} : vector<8x1024xbf16> to vector<8x512xbf16>
    %c0_5 = arith.constant 0 : index
    %c0_6 = arith.constant 0 : index
    %c0_7 = arith.constant 0 : index
    %7 = vector.load %arg4[%c0_5, %c0_6, %c0_7] : memref<9x8x8xbf16, #tpu.memory_space<vmem>>, vector<1x8x8xbf16>
    %8 = vector.shape_cast %7 : vector<1x8x8xbf16> to vector<8x8xbf16>
    %cst_8 = arith.constant dense<0.000000e+00> : vector<8x512xf32>
    %9 = tpu.matmul %8, %6, %cst_8 {dimension_numbers = #tpu.dot_dimension_numbers<[1], [0], [0], [1], [0, 0, 1, 1], [], []>} : vector<8x8xbf16>, vector<8x512xbf16>, vector<8x512xf32> -> vector<8x512xf32>
    %10 = arith.addf %5, %9 : vector<8x512xf32>
    %11 = vector.extract_strided_slice %4 {offsets = [0, 1], sizes = [8, 512], strides = [1, 1]} : vector<8x1024xbf16> to vector<8x512xbf16>
    %c1 = arith.constant 1 : index
    %c0_9 = arith.constant 0 : index
    %c0_10 = arith.constant 0 : index
    %12 = vector.load %arg4[%c1, %c0_9, %c0_10] : memref<9x8x8xbf16, #tpu.memory_space<vmem>>, vector<1x8x8xbf16>
    %13 = vector.shape_cast %12 : vector<1x8x8xbf16> to vector<8x8xbf16>
    %cst_11 = arith.constant dense<0.000000e+00> : vector<8x512xf32>
    %14 = tpu.matmul %13, %11, %cst_11 {dimension_numbers = #tpu.dot_dimension_numbers<[1], [0], [0], [1], [0, 0, 1, 1], [], []>} : vector<8x8xbf16>, vector<8x512xbf16>, vector<8x512xf32> -> vector<8x512xf32>
    %15 = arith.addf %10, %14 : vector<8x512xf32>
    %16 = vector.extract_strided_slice %4 {offsets = [0, 2], sizes = [8, 512], strides = [1, 1]} : vector<8x1024xbf16> to vector<8x512xbf16>
    %c2 = arith.constant 2 : index
    %c0_12 = arith.constant 0 : index
    %c0_13 = arith.constant 0 : index
    %17 = vector.load %arg4[%c2, %c0_12, %c0_13] : memref<9x8x8xbf16, #tpu.memory_space<vmem>>, vector<1x8x8xbf16>
    %18 = vector.shape_cast %17 : vector<1x8x8xbf16> to vector<8x8xbf16>
    %cst_14 = arith.constant dense<0.000000e+00> : vector<8x512xf32>
    %19 = tpu.matmul %18, %16, %cst_14 {dimension_numbers = #tpu.dot_dimension_numbers<[1], [0], [0], [1], [0, 0, 1, 1], [], []>} : vector<8x8xbf16>, vector<8x512xbf16>, vector<8x512xf32> -> vector<8x512xf32>
    %20 = arith.addf %15, %19 : vector<8x512xf32>
    %21 = vector.extract_strided_slice %4 {offsets = [0, 18], sizes = [8, 512], strides = [1, 1]} : vector<8x1024xbf16> to vector<8x512xbf16>
    %c3 = arith.constant 3 : index
    %c0_15 = arith.constant 0 : index
    %c0_16 = arith.constant 0 : index
    %22 = vector.load %arg4[%c3, %c0_15, %c0_16] : memref<9x8x8xbf16, #tpu.memory_space<vmem>>, vector<1x8x8xbf16>
    %23 = vector.shape_cast %22 : vector<1x8x8xbf16> to vector<8x8xbf16>
    %cst_17 = arith.constant dense<0.000000e+00> : vector<8x512xf32>
    %24 = tpu.matmul %23, %21, %cst_17 {dimension_numbers = #tpu.dot_dimension_numbers<[1], [0], [0], [1], [0, 0, 1, 1], [], []>} : vector<8x8xbf16>, vector<8x512xbf16>, vector<8x512xf32> -> vector<8x512xf32>
    %25 = arith.addf %20, %24 : vector<8x512xf32>
    %26 = vector.extract_strided_slice %4 {offsets = [0, 19], sizes = [8, 512], strides = [1, 1]} : vector<8x1024xbf16> to vector<8x512xbf16>
    %c4 = arith.constant 4 : index
    %c0_18 = arith.constant 0 : index
    %c0_19 = arith.constant 0 : index
    %27 = vector.load %arg4[%c4, %c0_18, %c0_19] : memref<9x8x8xbf16, #tpu.memory_space<vmem>>, vector<1x8x8xbf16>
    %28 = vector.shape_cast %27 : vector<1x8x8xbf16> to vector<8x8xbf16>
    %cst_20 = arith.constant dense<0.000000e+00> : vector<8x512xf32>
    %29 = tpu.matmul %28, %26, %cst_20 {dimension_numbers = #tpu.dot_dimension_numbers<[1], [0], [0], [1], [0, 0, 1, 1], [], []>} : vector<8x8xbf16>, vector<8x512xbf16>, vector<8x512xf32> -> vector<8x512xf32>
    %30 = arith.addf %25, %29 : vector<8x512xf32>
    %31 = vector.extract_strided_slice %4 {offsets = [0, 20], sizes = [8, 512], strides = [1, 1]} : vector<8x1024xbf16> to vector<8x512xbf16>
    %c5 = arith.constant 5 : index
    %c0_21 = arith.constant 0 : index
    %c0_22 = arith.constant 0 : index
    %32 = vector.load %arg4[%c5, %c0_21, %c0_22] : memref<9x8x8xbf16, #tpu.memory_space<vmem>>, vector<1x8x8xbf16>
    %33 = vector.shape_cast %32 : vector<1x8x8xbf16> to vector<8x8xbf16>
    %cst_23 = arith.constant dense<0.000000e+00> : vector<8x512xf32>
    %34 = tpu.matmul %33, %31, %cst_23 {dimension_numbers = #tpu.dot_dimension_numbers<[1], [0], [0], [1], [0, 0, 1, 1], [], []>} : vector<8x8xbf16>, vector<8x512xbf16>, vector<8x512xf32> -> vector<8x512xf32>
    %35 = arith.addf %30, %34 : vector<8x512xf32>
    %36 = vector.extract_strided_slice %4 {offsets = [0, 36], sizes = [8, 512], strides = [1, 1]} : vector<8x1024xbf16> to vector<8x512xbf16>
    %c6 = arith.constant 6 : index
    %c0_24 = arith.constant 0 : index
    %c0_25 = arith.constant 0 : index
    %37 = vector.load %arg4[%c6, %c0_24, %c0_25] : memref<9x8x8xbf16, #tpu.memory_space<vmem>>, vector<1x8x8xbf16>
    %38 = vector.shape_cast %37 : vector<1x8x8xbf16> to vector<8x8xbf16>
    %cst_26 = arith.constant dense<0.000000e+00> : vector<8x512xf32>
    %39 = tpu.matmul %38, %36, %cst_26 {dimension_numbers = #tpu.dot_dimension_numbers<[1], [0], [0], [1], [0, 0, 1, 1], [], []>} : vector<8x8xbf16>, vector<8x512xbf16>, vector<8x512xf32> -> vector<8x512xf32>
    %40 = arith.addf %35, %39 : vector<8x512xf32>
    %41 = vector.extract_strided_slice %4 {offsets = [0, 37], sizes = [8, 512], strides = [1, 1]} : vector<8x1024xbf16> to vector<8x512xbf16>
    %c7 = arith.constant 7 : index
    %c0_27 = arith.constant 0 : index
    %c0_28 = arith.constant 0 : index
    %42 = vector.load %arg4[%c7, %c0_27, %c0_28] : memref<9x8x8xbf16, #tpu.memory_space<vmem>>, vector<1x8x8xbf16>
    %43 = vector.shape_cast %42 : vector<1x8x8xbf16> to vector<8x8xbf16>
    %cst_29 = arith.constant dense<0.000000e+00> : vector<8x512xf32>
    %44 = tpu.matmul %43, %41, %cst_29 {dimension_numbers = #tpu.dot_dimension_numbers<[1], [0], [0], [1], [0, 0, 1, 1], [], []>} : vector<8x8xbf16>, vector<8x512xbf16>, vector<8x512xf32> -> vector<8x512xf32>
    %45 = arith.addf %40, %44 : vector<8x512xf32>
    %46 = vector.extract_strided_slice %4 {offsets = [0, 38], sizes = [8, 512], strides = [1, 1]} : vector<8x1024xbf16> to vector<8x512xbf16>
    %c8 = arith.constant 8 : index
    %c0_30 = arith.constant 0 : index
    %c0_31 = arith.constant 0 : index
    %47 = vector.load %arg4[%c8, %c0_30, %c0_31] : memref<9x8x8xbf16, #tpu.memory_space<vmem>>, vector<1x8x8xbf16>
    %48 = vector.shape_cast %47 : vector<1x8x8xbf16> to vector<8x8xbf16>
    %cst_32 = arith.constant dense<0.000000e+00> : vector<8x512xf32>
    %49 = tpu.matmul %48, %46, %cst_32 {dimension_numbers = #tpu.dot_dimension_numbers<[1], [0], [0], [1], [0, 0, 1, 1], [], []>} : vector<8x8xbf16>, vector<8x512xbf16>, vector<8x512xf32> -> vector<8x512xf32>
    %50 = arith.addf %45, %49 : vector<8x512xf32>
    %c0_33 = arith.constant 0 : index
    %c0_34 = arith.constant 0 : index
    %51 = vector.load %arg5[%c0_33, %c0_34] : memref<8x1xf32, #tpu.memory_space<vmem>>, vector<8x1xf32>
    %52 = vector.broadcast %51 : vector<8x1xf32> to vector<8x512xf32>
    %53 = arith.mulf %50, %52 : vector<8x512xf32>
    %c0_35 = arith.constant 0 : index
    %c0_36 = arith.constant 0 : index
    %54 = vector.load %arg6[%c0_35, %c0_36] : memref<8x1xf32, #tpu.memory_space<vmem>>, vector<8x1xf32>
    %55 = vector.broadcast %54 : vector<8x1xf32> to vector<8x512xf32>
    %56 = arith.addf %53, %55 : vector<8x512xf32>
    %cst_37 = arith.constant 0.000000e+00 : f32
    %57 = vector.broadcast %cst_37 : f32 to vector<8x512xf32>
    %58 = arith.cmpf ogt, %56, %57 : vector<8x512xf32>
    %cst_38 = arith.constant 0.00999999977 : f32
    %59 = vector.broadcast %cst_38 : f32 to vector<8x512xf32>
    %60 = arith.mulf %59, %56 : vector<8x512xf32>
    %61 = arith.select %58, %56, %60 : vector<8x512xi1>, vector<8x512xf32>
    %c0_39 = arith.constant 0 : index
    %c0_40 = arith.constant 0 : index
    %c0_41 = arith.constant 0 : index
    %62 = vector.load %arg7[%c0_39, %c0_40, %c0_41] : memref<1x8x512xf32, #tpu.memory_space<vmem>>, vector<1x8x512xf32>
    %63 = vector.shape_cast %62 : vector<1x8x512xf32> to vector<8x512xf32>
    %64 = vector.shape_cast %61 : vector<8x512xf32> to vector<1x8x512xf32>
    tpu.vector_store %arg7[%c0_39, %c0_40, %c0_41], %64 {strides = array<i32>} : memref<1x8x512xf32, #tpu.memory_space<vmem>>, vector<1x8x512xf32>,
    return
  }
  func.func @transform_0(%arg0: i32, %arg1: i32) -> (i32, i32, i32) {
    %c0_i32 = arith.constant 0 : i32
    %c0_i32_0 = arith.constant 0 : i32
    return %arg0, %c0_i32, %arg1 : i32, i32, i32
  }
  func.func @transform_1(%arg0: i32, %arg1: i32) -> (i32, i32, i32) {
    %c1_i32 = arith.constant 1 : i32
    %0 = arith.addi %arg1, %c1_i32 : i32
    %c0_i32 = arith.constant 0 : i32
    %c0_i32_0 = arith.constant 0 : i32
    return %arg0, %c0_i32, %0 : i32, i32, i32
  }
  func.func @transform_2(%arg0: i32, %arg1: i32) -> (i32, i32, i32) {
    %c0_i32 = arith.constant 0 : i32
    %c0_i32_0 = arith.constant 0 : i32
    %c0_i32_1 = arith.constant 0 : i32
    %c0_i32_2 = arith.constant 0 : i32
    return %c0_i32, %c0_i32_0, %c0_i32_1 : i32, i32, i32
  }
  func.func @transform_3(%arg0: i32, %arg1: i32) -> (i32, i32) {
    %c0_i32 = arith.constant 0 : i32
    %c0_i32_0 = arith.constant 0 : i32
    %c0_i32_1 = arith.constant 0 : i32
    return %c0_i32, %c0_i32_0 : i32, i32
  }
  func.func @transform_4(%arg0: i32, %arg1: i32) -> (i32, i32) {
    %c0_i32 = arith.constant 0 : i32
    %c0_i32_0 = arith.constant 0 : i32
    %c0_i32_1 = arith.constant 0 : i32
    return %c0_i32, %c0_i32_0 : i32, i32
  }
  func.func @transform_5(%arg0: i32, %arg1: i32) -> (i32, i32, i32) {
    %c0_i32 = arith.constant 0 : i32
    %c0_i32_0 = arith.constant 0 : i32
    return %arg0, %c0_i32, %arg1 : i32, i32, i32
  }
}

</mosaic_0001>

<llo_original>
// kernel: conv_bn_lrelu.1
$region0: #{conv_bn_lrelu.1}
  #allocation0 [shape = 'u32[]', space=smem, size = 0x4, offset = 0x4, fixed_abs, tag = 'smem constant byte address 0x4 - core index']
  #allocation1 [shape = 'u32[72,128]{1,0:T(1,128)}', space=vmem, size = 0x9000, scoped, tag = 'internal scratch']
  %s0 = inlined_call_operand.vmem [shape: bf16[2,8,1024], index: 0, kind: input, shape index: {}, may-alias: {0,1}]
  %s1 = inlined_call_operand.vmem [shape: bf16[2,8,1024], index: 1, kind: input, shape index: {}, may-alias: {0,1}]
  %s2 = inlined_call_operand.vmem [shape: bf16[9,8,8], index: 2, kind: input, shape index: {}]
  %s3 = inlined_call_operand.vmem [shape: f32[8,1], index: 3, kind: input, shape index: {}]
  %s4 = inlined_call_operand.vmem [shape: f32[8,1], index: 4, kind: input, shape index: {}]
  %s5 = inlined_call_operand.vmem [shape: f32[2,8,512], index: 5, kind: output, shape index: {}]
  %s6 = sld [smem:[#allocation0]]
  $region53: #{conv_bn_lrelu.1} parent=0
    _
  %s8 = ssub.s32 1, %s6
  %s9 = scalar_select 0, %s8, %s6
  loop: start=0, step=1, limit=4
  $region2: #{conv_bn_lrelu.1} parent=0 // loop_pre_header
    _
  $region3: #{conv_bn_lrelu.1} parent=0 // loop_header
    %s11 = sphi 0, %s15
    %p12 = scmp.ge.s32.totalorder %s11, 4
    %s18 = sphi 0, %s30
    %s19 = sphi 0, %s26
    %s20 = sphi 0, %s18
    %s21 = sphi 0, %s19
    %s22 = sphi 0, %s20
    %s23 = sphi 0, %s21
    %s35 = sphi 0, %s37
    %s38 = sphi 0, %s35
    %s39 = sphi 0, %s38
    %s55 = sphi 0, %s39
    %s65 = sphi 0, %s67
    %s68 = sphi 0, %s65
    %s69 = sphi 0, %s68
    %s85 = sphi 0, %s69
    %s89 = sphi 0, %s89
    %s91 = sphi 0, %s89
    %s92 = sphi 0, %s91
    %s106 = sphi 0, %s92
    %s110 = sphi 0, %s110
    %s112 = sphi 0, %s110
    %s113 = sphi 0, %s112
    %s127 = sphi 0, %s113
    %s131 = sphi 0, %s131
    %s133 = sphi 0, %s131
    %s134 = sphi 0, %s133
    %s148 = sphi 0, %s134
    %s156 = sphi 0, %s158
    %s159 = sphi 0, %s156
    %s160 = sphi 0, %s159
    %s176 = sphi 0, %s160
  $region4: #{conv_bn_lrelu.1} parent=0 // loop_header_branch
    %14 = sbr.rel (%p12) target = $region8
  $region5: #{conv_bn_lrelu.1} parent=0 // loop_body
    %s16 = ssub.s32 %s11, 1
    %s17 = ssub.s32 %s11, 2
    %s24 = sadd.s32 1, %s19
    %p25 = scmp.ge.s32.totalorder %s24, 1
    %s26 = scalar_select %p25, 0, %s24
    %s27 = sadd.s32 1, %s18
    %s28 = scalar_select %p25, %s27, %s18
    %p29 = scmp.ge.s32.totalorder %s28, 2
    %s30 = scalar_select %p29, 0, %s28
    %s31 = ssub.s32 %s18, %s30
    %s32 = ssub.s32 %s19, %s26
    %s33 = sor.u32 %s31, %s32
    %p34 = scmp.eq.s32.totalorder %s33, 0
    %s36 = sadd.s32 %s35, 1
    %s37 = scalar_select %p34, %s35, %s36
    %p40 = pneg %p34
    %p41 = scmp.eq.s32.totalorder %s11, 1
    %p42 = por %p40, %p41
    %p43 = scmp.ne.s32.totalorder %s35, %s38
    %p44 = scmp.eq.s32.totalorder %s11, 0
    %p45 = por %p43, %p44
    %p46 = scmp.ne.s32.totalorder %s35, %s38
    %p47 = scmp.eq.s32.totalorder %s16, 1
    %p48 = por %p46, %p47
    %p49 = scmp.ne.s32.totalorder %s38, %s39
    %p50 = scmp.eq.s32.totalorder %s16, 0
    %p51 = por %p49, %p50
    %p52 = scmp.ne.s32.totalorder %s38, %s39
    %p53 = scmp.eq.s32.totalorder %s17, 1
    %p54 = por %p52, %p53
    %p56 = scmp.ne.s32.totalorder %s39, %s55
    %p57 = scmp.eq.s32.totalorder %s17, 0
    %p58 = por %p56, %p57
    %s59 = sadd.s32 %s19, 1
    %s60 = sadd.s32 %s26, 1
    %s61 = ssub.s32 %s18, %s30
    %s62 = ssub.s32 %s59, %s60
    %s63 = sor.u32 %s61, %s62
    %p64 = scmp.eq.s32.totalorder %s63, 0
    %s66 = sadd.s32 %s65, 1
    %s67 = scalar_select %p64, %s65, %s66
    %p70 = pneg %p64
    %p71 = scmp.eq.s32.totalorder %s11, 1
    %p72 = por %p70, %p71
    %p73 = scmp.ne.s32.totalorder %s65, %s68
    %p74 = scmp.eq.s32.totalorder %s11, 0
    %p75 = por %p73, %p74
    %p76 = scmp.ne.s32.totalorder %s65, %s68
    %p77 = scmp.eq.s32.totalorder %s16, 1
    %p78 = por %p76, %p77
    %p79 = scmp.ne.s32.totalorder %s68, %s69
    %p80 = scmp.eq.s32.totalorder %s16, 0
    %p81 = por %p79, %p80
    %p82 = scmp.ne.s32.totalorder %s68, %s69
    %p83 = scmp.eq.s32.totalorder %s17, 1
    %p84 = por %p82, %p83
    %p86 = scmp.ne.s32.totalorder %s69, %s85
    %p87 = scmp.eq.s32.totalorder %s17, 0
    %p88 = por %p86, %p87
    %s90 = sadd.s32 %s89, 1
    %p93 = scmp.eq.s32.totalorder %s11, 1
    %p94 = scmp.ne.s32.totalorder %s89, %s91
    %p95 = scmp.eq.s32.totalorder %s11, 0
    %p96 = por %p94, %p95
    %p97 = scmp.ne.s32.totalorder %s89, %s91
    %p98 = scmp.eq.s32.totalorder %s16, 1
    %p99 = por %p97, %p98
    %p100 = scmp.ne.s32.totalorder %s91, %s92
    %p101 = scmp.eq.s32.totalorder %s16, 0
    %p102 = por %p100, %p101
    %p103 = scmp.ne.s32.totalorder %s91, %s92
    %p104 = scmp.eq.s32.totalorder %s17, 1
    %p105 = por %p103, %p104
    %p107 = scmp.ne.s32.totalorder %s92, %s106
    %p108 = scmp.eq.s32.totalorder %s17, 0
    %p109 = por %p107, %p108
    %s111 = sadd.s32 %s110, 1
    %p114 = scmp.eq.s32.totalorder %s11, 1
    %p115 = scmp.ne.s32.totalorder %s110, %s112
    %p116 = scmp.eq.s32.totalorder %s11, 0
    %p117 = por %p115, %p116
    %p118 = scmp.ne.s32.totalorder %s110, %s112
    %p119 = scmp.eq.s32.totalorder %s16, 1
    %p120 = por %p118, %p119
    %p121 = scmp.ne.s32.totalorder %s112, %s113
    %p122 = scmp.eq.s32.totalorder %s16, 0
    %p123 = por %p121, %p122
    %p124 = scmp.ne.s32.totalorder %s112, %s113
    %p125 = scmp.eq.s32.totalorder %s17, 1
    %p126 = por %p124, %p125
    %p128 = scmp.ne.s32.totalorder %s113, %s127
    %p129 = scmp.eq.s32.totalorder %s17, 0
    %p130 = por %p128, %p129
    %s132 = sadd.s32 %s131, 1
    %p135 = scmp.eq.s32.totalorder %s11, 1
    %p136 = scmp.ne.s32.totalorder %s131, %s133
    %p137 = scmp.eq.s32.totalorder %s11, 0
    %p138 = por %p136, %p137
    %p139 = scmp.ne.s32.totalorder %s131, %s133
    %p140 = scmp.eq.s32.totalorder %s16, 1
    %p141 = por %p139, %p140
    %p142 = scmp.ne.s32.totalorder %s133, %s134
    %p143 = scmp.eq.s32.totalorder %s16, 0
    %p144 = por %p142, %p143
    %p145 = scmp.ne.s32.totalorder %s133, %s134
    %p146 = scmp.eq.s32.totalorder %s17, 1
    %p147 = por %p145, %p146
    %p149 = scmp.ne.s32.totalorder %s134, %s148
    %p150 = scmp.eq.s32.totalorder %s17, 0
    %p151 = por %p149, %p150
    %s152 = ssub.s32 %s18, %s30
    %s153 = ssub.s32 %s19, %s26
    %s154 = sor.u32 %s152, %s153
    %p155 = scmp.eq.s32.totalorder %s154, 0
    %s157 = sadd.s32 %s156, 1
    %s158 = scalar_select %p155, %s156, %s157
    %p161 = pneg %p155
    %p162 = scmp.eq.s32.totalorder %s11, 1
    %p163 = por %p161, %p162
    %p164 = scmp.ne.s32.totalorder %s156, %s159
    %p165 = scmp.eq.s32.totalorder %s11, 0
    %p166 = por %p164, %p165
    %p167 = scmp.ne.s32.totalorder %s156, %s159
    %p168 = scmp.eq.s32.totalorder %s16, 1
    %p169 = por %p167, %p168
    %p170 = scmp.ne.s32.totalorder %s159, %s160
    %p171 = scmp.eq.s32.totalorder %s16, 0
    %p172 = por %p170, %p171
    %p173 = scmp.ne.s32.totalorder %s159, %s160
    %p174 = scmp.eq.s32.totalorder %s17, 1
    %p175 = por %p173, %p174
    %p177 = scmp.ne.s32.totalorder %s160, %s176
    %p178 = scmp.eq.s32.totalorder %s17, 0
    %p179 = por %p177, %p178
    %p180 = scmp.le.s32.totalorder 1, %s11
    %p181 = scmp.lt.s32.totalorder %s11, 3
    %p182 = pnand %p180, %p181
    %p183 = pneg %p182
    // Predicated region
    $region9: #{conv_bn_lrelu.1} parent=5 // pred_check
      _
    $region10: #{conv_bn_lrelu.1} parent=5 // pred_check_branch
      %185 = sbr.rel (%p182) target = $region12
    $region11: #{conv_bn_lrelu.1} parent=5 // pred_region
      %s186 = ssub.s32 %s11, 1
      // Predicated region
      $region13: #{conv_bn_lrelu.1} parent=11 // pred_check
        %p187 = pneg %p102
      $region14: #{conv_bn_lrelu.1} parent=11 // pred_check_branch
        %189 = sbr.rel (%p187) target = $region16
      $region15: #{conv_bn_lrelu.1} parent=11 // pred_region
        _
      $region16: #{conv_bn_lrelu.1} parent=11 // pred_fallthru
        _
      // Predicated region
      $region17: #{conv_bn_lrelu.1} parent=11 // pred_check
        %p190 = pneg %p123
      $region18: #{conv_bn_lrelu.1} parent=11 // pred_check_branch
        %192 = sbr.rel (%p190) target = $region20
      $region19: #{conv_bn_lrelu.1} parent=11 // pred_region
        _
      $region20: #{conv_bn_lrelu.1} parent=11 // pred_fallthru
        _
      // Predicated region
      $region21: #{conv_bn_lrelu.1} parent=11 // pred_check
        %p193 = pneg %p144
      $region22: #{conv_bn_lrelu.1} parent=11 // pred_check_branch
        %195 = sbr.rel (%p193) target = $region24
      $region23: #{conv_bn_lrelu.1} parent=11 // pred_region
        _
      $region24: #{conv_bn_lrelu.1} parent=11 // pred_fallthru
        _
    $region12: #{conv_bn_lrelu.1} parent=5 // pred_fallthru
      _
    %p196 = scmp.lt.s32.totalorder %s11, 2
    // Predicated region
    $region25: #{conv_bn_lrelu.1} parent=5 // pred_check
      %p197 = pneg %p196
    $region26: #{conv_bn_lrelu.1} parent=5 // pred_check_branch
      %199 = sbr.rel (%p197) target = $region28
    $region27: #{conv_bn_lrelu.1} parent=5 // pred_region
      // Predicated region
      $region29: #{conv_bn_lrelu.1} parent=27 // pred_check
        %p200 = pneg %p45
      $region30: #{conv_bn_lrelu.1} parent=27 // pred_check_branch
        %202 = sbr.rel (%p200) target = $region32
      $region31: #{conv_bn_lrelu.1} parent=27 // pred_region
        %s203 = smul.u32 4, %s19
        %p204 = scmp.lt.s32.totalorder %s18, 1
        %s205 = scalar_select %p204, %s18, 1
        %p206 = scmp.lt.s32.totalorder %s203, 7
        %s207 = scalar_select %p206, %s203, 7
        %s208 = smul.addr %s205, 8
        %s209 = sadd.s32 %s207, %s208
        %s210 = smul.addr %s209, 4
        %s211 = scalar_lea.vmem %s0, %s210
        %s212 = smul.u32 4, %s19
      $region32: #{conv_bn_lrelu.1} parent=27 // pred_fallthru
        _
      // Predicated region
      $region33: #{conv_bn_lrelu.1} parent=27 // pred_check
        %p213 = pneg %p75
      $region34: #{conv_bn_lrelu.1} parent=27 // pred_check_branch
        %215 = sbr.rel (%p213) target = $region36
      $region35: #{conv_bn_lrelu.1} parent=27 // pred_region
        %s216 = sadd.s32 %s19, 1
        %s217 = smul.u32 4, %s216
        %p218 = scmp.lt.s32.totalorder %s18, 1
        %s219 = scalar_select %p218, %s18, 1
        %p220 = scmp.lt.s32.totalorder %s217, 7
        %s221 = scalar_select %p220, %s217, 7
        %s222 = smul.addr %s219, 8
        %s223 = sadd.s32 %s221, %s222
        %s224 = smul.addr %s223, 4
        %s225 = scalar_lea.vmem %s1, %s224
        %s226 = sadd.s32 %s19, 1
        %s227 = smul.u32 4, %s226
      $region36: #{conv_bn_lrelu.1} parent=27 // pred_fallthru
        _
    $region28: #{conv_bn_lrelu.1} parent=5 // pred_fallthru
      _
    %p228 = scmp.le.s32.totalorder 1, %s11
    %p229 = scmp.lt.s32.totalorder %s11, 3
    %p230 = pnand %p228, %p229
    %p231 = pneg %p230
    // Predicated region
    $region37: #{conv_bn_lrelu.1} parent=5 // pred_check
      _
    $region38: #{conv_bn_lrelu.1} parent=5 // pred_check_branch
      %233 = sbr.rel (%p230) target = $region40
    $region39: #{conv_bn_lrelu.1} parent=5 // pred_region
      %s234 = ssub.s32 %s11, 1
      %s235 = smul.u32 4, %s21
      %p236 = scmp.lt.s32.totalorder %s20, 1
      %s237 = scalar_select %p236, %s20, 1
      %p238 = scmp.lt.s32.totalorder %s235, 7
      %s239 = scalar_select %p238, %s235, 7
      %s240 = smul.addr %s237, 8
      %s241 = sadd.s32 %s239, %s240
      %s242 = smul.addr %s241, 4
      %s243 = scalar_lea.vmem %s0, %s242
      %p244 = pneg %p51
      %p245 = pneg %p48
      %s246 = sadd.s32 %s21, 1
      %s247 = smul.u32 4, %s246
      %p248 = scmp.lt.s32.totalorder %s20, 1
      %s249 = scalar_select %p248, %s20, 1
      %p250 = scmp.lt.s32.totalorder %s247, 7
      %s251 = scalar_select %p250, %s247, 7
      %s252 = smul.addr %s249, 8
      %s253 = sadd.s32 %s251, %s252
      %s254 = smul.addr %s253, 4
      %s255 = scalar_lea.vmem %s1, %s254
      %p256 = pneg %p81
      %p257 = pneg %p78
      %p258 = pneg %p102
      %p259 = pneg %p99
      %p260 = pneg %p123
      %p261 = pneg %p120
      %p262 = pneg %p144
      %p263 = pneg %p141
      %p264 = pneg %p172
      %p265 = pneg %p169
      %s266 = smul.u32 4, %s21
      %p267 = scmp.lt.s32.totalorder %s20, 1
      %s268 = scalar_select %p267, %s20, 1
      %p269 = scmp.lt.s32.totalorder %s266, 3
      %s270 = scalar_select %p269, %s266, 3
      %s271 = smul.addr %s268, 4
      %s272 = sadd.s32 %s270, %s271
      %s273 = smul.addr %s272, 8
      %s274 = scalar_lea.vmem %s5, %s273
      %s275 = smul.u32 4, %s21
      %p276 = scmp.lt.s32.totalorder %s20, 1
      %s277 = scalar_select %p276, %s20, 1
      %p278 = scmp.lt.s32.totalorder %s275, 7
      %s279 = scalar_select %p278, %s275, 7
      %s280 = smul.addr %s277, 8
      %s281 = sadd.s32 %s279, %s280
      %s282 = smul.addr %s281, 4
      %s283 = scalar_lea.vmem %s0, %s282
      %s284 = smul.u32 4, %s21
      %s285 = sadd.s32 %s21, 1
      %s286 = smul.u32 4, %s285
      %p287 = scmp.lt.s32.totalorder %s20, 1
      %s288 = scalar_select %p287, %s20, 1
      %p289 = scmp.lt.s32.totalorder %s286, 7
      %s290 = scalar_select %p289, %s286, 7
      %s291 = smul.addr %s288, 8
      %s292 = sadd.s32 %s290, %s291
      %s293 = smul.addr %s292, 4
      %s294 = scalar_lea.vmem %s1, %s293
      %s295 = sadd.s32 %s21, 1
      %s296 = smul.u32 4, %s295
      %s297 = smul.u32 4, %s21
      %p298 = scmp.lt.s32.totalorder %s20, 1
      %s299 = scalar_select %p298, %s20, 1
      %p300 = scmp.lt.s32.totalorder %s297, 3
      %s301 = scalar_select %p300, %s297, 3
      %s302 = smul.addr %s299, 4
      %s303 = sadd.s32 %s301, %s302
      %s304 = smul.addr %s303, 8
      %s305 = scalar_lea.vmem %s5, %s304
      %s306 = smul.u32 4, %s21
      %v308 = vld [vmem:[%s283] sm:$0xff]
      %v309 = vld [vmem:[%s283 + $0x8] sm:$0xff]
      %v310 = vld [vmem:[%s294] sm:$0xff]
      %v313 = vunpack.c.l.b16 %v308
      %v314 = vunpack.c.h.b16 %v308
      %v315 = vunpack.c.l.b16 %v309
      %v316 = vunpack.c.h.b16 %v309
      %v317 = vpack.c.b16 %v313, %v313
      %v318 = vpack.c.b16 %v314, %v314
      %v319 = vpack.c.b16 %v315, %v315
      %v320 = vpack.c.b16 %v316, %v316
      %v322 = vunpack.c.l.b16 %v310
      %v323 = vpack.c.b16 %v322, %v322
      %v324 = vld [vmem:[%s2] sm:$0xf]
      %s325 = scalar_lea.vmem %s2, 4
      %v326 = vld [vmem:[%s325] sm:$0xf]
      %327 = vrot.lane.b32.xlu0 %v317, 127
      %v328 = vpop.permute.xlu0 %327
      %329 = vrot.lane.b32.xlu0 %v318, 127
      %v330 = vpop.permute.xlu0 %329
      %331 = vrot.lane.b32.xlu0 %v319, 127
      %v332 = vpop.permute.xlu0 %331
      %333 = vrot.lane.b32.xlu0 %v320, 127
      %v334 = vpop.permute.xlu0 %333
      %335 = vrot.lane.b32.xlu0 %v323, 127
      %v336 = vpop.permute.xlu0 %335
      %vm337 = vcmask 1039360
      %v338 = vsel %vm337, %v328, %v330
      %v339 = vsel %vm337, %v330, %v332
      %v340 = vsel %vm337, %v332, %v334
      %v341 = vsel %vm337, %v334, %v336
      %vm342 = vcmask 64512
      %v344 = vsel %vm342, %v326, 0
      %vm346 = vcmask 1043456
      %v348 = vsel %vm346, %v338, 0
      %v351 = vsel %vm346, %v339, 0
      %v354 = vsel %vm346, %v340, 0
      %v357 = vsel %vm346, %v341, 0
      %359 = vmatpush.bf16.msra.mxu0 0
      %360 = vmatpush.bf16.msra.mxu0 0
      %361 = vmatpush.bf16.msra.mxu0 0
      %362 = vmatpush.bf16.msra.mxu0 0
      %363 = vmatpush.bf16.msra.mxu0 0
      %364 = vmatpush.bf16.msra.mxu0 0
      %365 = vmatpush.bf16.msra.mxu0 0
      %366 = vmatpush.bf16.msra.mxu0 %v348
      %367 = vmatmul.bf16.gmra.mxu0 %v344
      %v368 = vpop.f32.mrf.mxu0
      %v369 = vadd.f32 0.0, %v368
      %v370 = vpop.f32.mrf.mxu0
      %371 = vdwg.mxu0
      %372 = vmatpush.bf16.msra.mxu0 0
      %373 = vmatpush.bf16.msra.mxu0 0
      %374 = vmatpush.bf16.msra.mxu0 0
      %375 = vmatpush.bf16.msra.mxu0 0
      %376 = vmatpush.bf16.msra.mxu0 0
      %377 = vmatpush.bf16.msra.mxu0 0
      %378 = vmatpush.bf16.msra.mxu0 0
      %379 = vmatpush.bf16.msra.mxu0 %v351
      %380 = vmatmul.bf16.gmra.mxu0 %v344
      %v381 = vpop.f32.mrf.mxu0
      %v382 = vadd.f32 0.0, %v381
      %v383 = vpop.f32.mrf.mxu0
      %384 = vdwg.mxu0
      %385 = vmatpush.bf16.msra.mxu0 0
      %386 = vmatpush.bf16.msra.mxu0 0
      %387 = vmatpush.bf16.msra.mxu0 0
      %388 = vmatpush.bf16.msra.mxu0 0
      %389 = vmatpush.bf16.msra.mxu0 0
      %390 = vmatpush.bf16.msra.mxu0 0
      %391 = vmatpush.bf16.msra.mxu0 0
      %392 = vmatpush.bf16.msra.mxu0 %v354
      %393 = vmatmul.bf16.gmra.mxu0 %v344
      %v394 = vpop.f32.mrf.mxu0
      %v395 = vadd.f32 0.0, %v394
      %v396 = vpop.f32.mrf.mxu0
      %397 = vdwg.mxu0
      %398 = vmatpush.bf16.msra.mxu0 0
      %399 = vmatpush.bf16.msra.mxu0 0
      %400 = vmatpush.bf16.msra.mxu0 0
      %401 = vmatpush.bf16.msra.mxu0 0
      %402 = vmatpush.bf16.msra.mxu0 0
      %403 = vmatpush.bf16.msra.mxu0 0
      %404 = vmatpush.bf16.msra.mxu0 0
      %405 = vmatpush.bf16.msra.mxu0 %v357
      %406 = vmatmul.bf16.gmra.mxu0 %v344
      %v407 = vpop.f32.mrf.mxu0
      %v408 = vadd.f32 0.0, %v407
      %v409 = vpop.f32.mrf.mxu0
      %410 = vdwg.mxu0
      %v412 = vsel %vm342, %v324, 0
      %v415 = vsel %vm346, %v317, 0
      %v418 = vsel %vm346, %v318, 0
      %v421 = vsel %vm346, %v319, 0
      %v424 = vsel %vm346, %v320, 0
      %426 = vmatpush.bf16.msra.mxu0 0
      %427 = vmatpush.bf16.msra.mxu0 0
      %428 = vmatpush.bf16.msra.mxu0 0
      %429 = vmatpush.bf16.msra.mxu0 0
      %430 = vmatpush.bf16.msra.mxu0 0
      %431 = vmatpush.bf16.msra.mxu0 0
      %432 = vmatpush.bf16.msra.mxu0 0
      %433 = vmatpush.bf16.msra.mxu0 %v415
      %434 = vmatmul.bf16.gmra.mxu0 %v412
      %v435 = vpop.f32.mrf.mxu0
      %v436 = vadd.f32 %v369, %v435
      %v437 = vpop.f32.mrf.mxu0
      %438 = vdwg.mxu0
      %439 = vmatpush.bf16.msra.mxu0 0
      %440 = vmatpush.bf16.msra.mxu0 0
      %441 = vmatpush.bf16.msra.mxu0 0
      %442 = vmatpush.bf16.msra.mxu0 0
      %443 = vmatpush.bf16.msra.mxu0 0
      %444 = vmatpush.bf16.msra.mxu0 0
      %445 = vmatpush.bf16.msra.mxu0 0
      %446 = vmatpush.bf16.msra.mxu0 %v418
      %447 = vmatmul.bf16.gmra.mxu0 %v412
      %v448 = vpop.f32.mrf.mxu0
      %v449 = vadd.f32 %v382, %v448
      %v450 = vpop.f32.mrf.mxu0
      %451 = vdwg.mxu0
      %452 = vmatpush.bf16.msra.mxu0 0
      %453 = vmatpush.bf16.msra.mxu0 0
      %454 = vmatpush.bf16.msra.mxu0 0
      %455 = vmatpush.bf16.msra.mxu0 0
      %456 = vmatpush.bf16.msra.mxu0 0
      %457 = vmatpush.bf16.msra.mxu0 0
      %458 = vmatpush.bf16.msra.mxu0 0
      %459 = vmatpush.bf16.msra.mxu0 %v421
      %460 = vmatmul.bf16.gmra.mxu0 %v412
      %v461 = vpop.f32.mrf.mxu0
      %v462 = vadd.f32 %v395, %v461
      %v463 = vpop.f32.mrf.mxu0
      %464 = vdwg.mxu0
      %465 = vmatpush.bf16.msra.mxu0 0
      %466 = vmatpush.bf16.msra.mxu0 0
      %467 = vmatpush.bf16.msra.mxu0 0
      %468 = vmatpush.bf16.msra.mxu0 0
      %469 = vmatpush.bf16.msra.mxu0 0
      %470 = vmatpush.bf16.msra.mxu0 0
      %471 = vmatpush.bf16.msra.mxu0 0
      %472 = vmatpush.bf16.msra.mxu0 %v424
      %473 = vmatmul.bf16.gmra.mxu0 %v412
      %v474 = vpop.f32.mrf.mxu0
      %v475 = vadd.f32 %v408, %v474
      %v476 = vpop.f32.mrf.mxu0
      %477 = vdwg.mxu0
      %s478 = scalar_lea.vmem %s2, 8
      %v479 = vld [vmem:[%s478] sm:$0xf]
      %480 = vrot.lane.b32.xlu0 %v317, 126
      %v481 = vpop.permute.xlu0 %480
      %482 = vrot.lane.b32.xlu0 %v318, 126
      %v483 = vpop.permute.xlu0 %482
      %484 = vrot.lane.b32.xlu0 %v319, 126
      %v485 = vpop.permute.xlu0 %484
      %486 = vrot.lane.b32.xlu0 %v320, 126
      %v487 = vpop.permute.xlu0 %486
      %488 = vrot.lane.b32.xlu0 %v323, 126
      %v489 = vpop.permute.xlu0 %488
      %vm490 = vcmask 1031168
      %v491 = vsel %vm490, %v481, %v483
      %v492 = vsel %vm490, %v483, %v485
      %v493 = vsel %vm490, %v485, %v487
      %v494 = vsel %vm490, %v487, %v489
      %v496 = vsel %vm342, %v479, 0
      %v499 = vsel %vm346, %v491, 0
      %v502 = vsel %vm346, %v492, 0
      %v505 = vsel %vm346, %v493, 0
      %v508 = vsel %vm346, %v494, 0
      %510 = vmatpush.bf16.msra.mxu0 0
      %511 = vmatpush.bf16.msra.mxu0 0
      %512 = vmatpush.bf16.msra.mxu0 0
      %513 = vmatpush.bf16.msra.mxu0 0
      %514 = vmatpush.bf16.msra.mxu0 0
      %515 = vmatpush.bf16.msra.mxu0 0
      %516 = vmatpush.bf16.msra.mxu0 0
      %517 = vmatpush.bf16.msra.mxu0 %v499
      %518 = vmatmul.bf16.gmra.mxu0 %v496
      %v519 = vpop.f32.mrf.mxu0
      %v520 = vadd.f32 0.0, %v519
      %v521 = vpop.f32.mrf.mxu0
      %522 = vdwg.mxu0
      %523 = vmatpush.bf16.msra.mxu0 0
      %524 = vmatpush.bf16.msra.mxu0 0
      %525 = vmatpush.bf16.msra.mxu0 0
      %526 = vmatpush.bf16.msra.mxu0 0
      %527 = vmatpush.bf16.msra.mxu0 0
      %528 = vmatpush.bf16.msra.mxu0 0
      %529 = vmatpush.bf16.msra.mxu0 0
      %530 = vmatpush.bf16.msra.mxu0 %v502
      %531 = vmatmul.bf16.gmra.mxu0 %v496
      %v532 = vpop.f32.mrf.mxu0
      %v533 = vadd.f32 0.0, %v532
      %v534 = vpop.f32.mrf.mxu0
      %535 = vdwg.mxu0
      %536 = vmatpush.bf16.msra.mxu0 0
      %537 = vmatpush.bf16.msra.mxu0 0
      %538 = vmatpush.bf16.msra.mxu0 0
      %539 = vmatpush.bf16.msra.mxu0 0
      %540 = vmatpush.bf16.msra.mxu0 0
      %541 = vmatpush.bf16.msra.mxu0 0
      %542 = vmatpush.bf16.msra.mxu0 0
      %543 = vmatpush.bf16.msra.mxu0 %v505
      %544 = vmatmul.bf16.gmra.mxu0 %v496
      %v545 = vpop.f32.mrf.mxu0
      %v546 = vadd.f32 0.0, %v545
      %v547 = vpop.f32.mrf.mxu0
      %548 = vdwg.mxu0
      %549 = vmatpush.bf16.msra.mxu0 0
      %550 = vmatpush.bf16.msra.mxu0 0
      %551 = vmatpush.bf16.msra.mxu0 0
      %552 = vmatpush.bf16.msra.mxu0 0
      %553 = vmatpush.bf16.msra.mxu0 0
      %554 = vmatpush.bf16.msra.mxu0 0
      %555 = vmatpush.bf16.msra.mxu0 0
      %556 = vmatpush.bf16.msra.mxu0 %v508
      %557 = vmatmul.bf16.gmra.mxu0 %v496
      %v558 = vpop.f32.mrf.mxu0
      %v559 = vadd.f32 0.0, %v558
      %v560 = vpop.f32.mrf.mxu0
      %561 = vdwg.mxu0
      %v562 = vadd.f32 %v436, %v520
      %v563 = vadd.f32 %v449, %v533
      %v564 = vadd.f32 %v462, %v546
      %v565 = vadd.f32 %v475, %v559
      %s566 = scalar_lea.vmem %s2, 12
      %v567 = vld [vmem:[%s566] sm:$0xf]
      %568 = vrot.lane.b32.xlu0 %v317, 110
      %v569 = vpop.permute.xlu0 %568
      %570 = vrot.lane.b32.xlu0 %v318, 110
      %v571 = vpop.permute.xlu0 %570
      %572 = vrot.lane.b32.xlu0 %v319, 110
      %v573 = vpop.permute.xlu0 %572
      %574 = vrot.lane.b32.xlu0 %v320, 110
      %v575 = vpop.permute.xlu0 %574
      %576 = vrot.lane.b32.xlu0 %v323, 110
      %v577 = vpop.permute.xlu0 %576
      %vm578 = vcmask 900096
      %v579 = vsel %vm578, %v569, %v571
      %v580 = vsel %vm578, %v571, %v573
      %v581 = vsel %vm578, %v573, %v575
      %v582 = vsel %vm578, %v575, %v577
      %v584 = vsel %vm342, %v567, 0
      %v587 = vsel %vm346, %v579, 0
      %v590 = vsel %vm346, %v580, 0
      %v593 = vsel %vm346, %v581, 0
      %v596 = vsel %vm346, %v582, 0
      %598 = vmatpush.bf16.msra.mxu0 0
      %599 = vmatpush.bf16.msra.mxu0 0
      %600 = vmatpush.bf16.msra.mxu0 0
      %601 = vmatpush.bf16.msra.mxu0 0
      %602 = vmatpush.bf16.msra.mxu0 0
      %603 = vmatpush.bf16.msra.mxu0 0
      %604 = vmatpush.bf16.msra.mxu0 0
      %605 = vmatpush.bf16.msra.mxu0 %v587
      %606 = vmatmul.bf16.gmra.mxu0 %v584
      %v607 = vpop.f32.mrf.mxu0
      %v608 = vadd.f32 0.0, %v607
      %v609 = vpop.f32.mrf.mxu0
      %610 = vdwg.mxu0
      %611 = vmatpush.bf16.msra.mxu0 0
      %612 = vmatpush.bf16.msra.mxu0 0
      %613 = vmatpush.bf16.msra.mxu0 0
      %614 = vmatpush.bf16.msra.mxu0 0
      %615 = vmatpush.bf16.msra.mxu0 0
      %616 = vmatpush.bf16.msra.mxu0 0
      %617 = vmatpush.bf16.msra.mxu0 0
      %618 = vmatpush.bf16.msra.mxu0 %v590
      %619 = vmatmul.bf16.gmra.mxu0 %v584
      %v620 = vpop.f32.mrf.mxu0
      %v621 = vadd.f32 0.0, %v620
      %v622 = vpop.f32.mrf.mxu0
      %623 = vdwg.mxu0
      %624 = vmatpush.bf16.msra.mxu0 0
      %625 = vmatpush.bf16.msra.mxu0 0
      %626 = vmatpush.bf16.msra.mxu0 0
      %627 = vmatpush.bf16.msra.mxu0 0
      %628 = vmatpush.bf16.msra.mxu0 0
      %629 = vmatpush.bf16.msra.mxu0 0
      %630 = vmatpush.bf16.msra.mxu0 0
      %631 = vmatpush.bf16.msra.mxu0 %v593
      %632 = vmatmul.bf16.gmra.mxu0 %v584
      %v633 = vpop.f32.mrf.mxu0
      %v634 = vadd.f32 0.0, %v633
      %v635 = vpop.f32.mrf.mxu0
      %636 = vdwg.mxu0
      %637 = vmatpush.bf16.msra.mxu0 0
      %638 = vmatpush.bf16.msra.mxu0 0
      %639 = vmatpush.bf16.msra.mxu0 0
      %640 = vmatpush.bf16.msra.mxu0 0
      %641 = vmatpush.bf16.msra.mxu0 0
      %642 = vmatpush.bf16.msra.mxu0 0
      %643 = vmatpush.bf16.msra.mxu0 0
      %644 = vmatpush.bf16.msra.mxu0 %v596
      %645 = vmatmul.bf16.gmra.mxu0 %v584
      %v646 = vpop.f32.mrf.mxu0
      %v647 = vadd.f32 0.0, %v646
      %v648 = vpop.f32.mrf.mxu0
      %649 = vdwg.mxu0
      %v650 = vadd.f32 %v562, %v608
      %v651 = vadd.f32 %v563, %v621
      %v652 = vadd.f32 %v564, %v634
      %v653 = vadd.f32 %v565, %v647
      %s654 = scalar_lea.vmem %s2, 16
      %v655 = vld [vmem:[%s654] sm:$0xf]
      %656 = vrot.lane.b32.xlu0 %v317, 109
      %v657 = vpop.permute.xlu0 %656
      %658 = vrot.lane.b32.xlu0 %v318, 109
      %v659 = vpop.permute.xlu0 %658
      %660 = vrot.lane.b32.xlu0 %v319, 109
      %v661 = vpop.permute.xlu0 %660
      %662 = vrot.lane.b32.xlu0 %v320, 109
      %v663 = vpop.permute.xlu0 %662
      %664 = vrot.lane.b32.xlu0 %v323, 109
      %v665 = vpop.permute.xlu0 %664
      %vm666 = vcmask 891904
      %v667 = vsel %vm666, %v657, %v659
      %v668 = vsel %vm666, %v659, %v661
      %v669 = vsel %vm666, %v661, %v663
      %v670 = vsel %vm666, %v663, %v665
      %v672 = vsel %vm342, %v655, 0
      %v675 = vsel %vm346, %v667, 0
      %v678 = vsel %vm346, %v668, 0
      %v681 = vsel %vm346, %v669, 0
      %v684 = vsel %vm346, %v670, 0
      %686 = vmatpush.bf16.msra.mxu0 0
      %687 = vmatpush.bf16.msra.mxu0 0
      %688 = vmatpush.bf16.msra.mxu0 0
      %689 = vmatpush.bf16.msra.mxu0 0
      %690 = vmatpush.bf16.msra.mxu0 0
      %691 = vmatpush.bf16.msra.mxu0 0
      %692 = vmatpush.bf16.msra.mxu0 0
      %693 = vmatpush.bf16.msra.mxu0 %v675
      %694 = vmatmul.bf16.gmra.mxu0 %v672
      %v695 = vpop.f32.mrf.mxu0
      %v696 = vadd.f32 0.0, %v695
      %v697 = vpop.f32.mrf.mxu0
      %698 = vdwg.mxu0
      %699 = vmatpush.bf16.msra.mxu0 0
      %700 = vmatpush.bf16.msra.mxu0 0
      %701 = vmatpush.bf16.msra.mxu0 0
      %702 = vmatpush.bf16.msra.mxu0 0
      %703 = vmatpush.bf16.msra.mxu0 0
      %704 = vmatpush.bf16.msra.mxu0 0
      %705 = vmatpush.bf16.msra.mxu0 0
      %706 = vmatpush.bf16.msra.mxu0 %v678
      %707 = vmatmul.bf16.gmra.mxu0 %v672
      %v708 = vpop.f32.mrf.mxu0
      %v709 = vadd.f32 0.0, %v708
      %v710 = vpop.f32.mrf.mxu0
      %711 = vdwg.mxu0
      %712 = vmatpush.bf16.msra.mxu0 0
      %713 = vmatpush.bf16.msra.mxu0 0
      %714 = vmatpush.bf16.msra.mxu0 0
      %715 = vmatpush.bf16.msra.mxu0 0
      %716 = vmatpush.bf16.msra.mxu0 0
      %717 = vmatpush.bf16.msra.mxu0 0
      %718 = vmatpush.bf16.msra.mxu0 0
      %719 = vmatpush.bf16.msra.mxu0 %v681
      %720 = vmatmul.bf16.gmra.mxu0 %v672
      %v721 = vpop.f32.mrf.mxu0
      %v722 = vadd.f32 0.0, %v721
      %v723 = vpop.f32.mrf.mxu0
      %724 = vdwg.mxu0
      %725 = vmatpush.bf16.msra.mxu0 0
      %726 = vmatpush.bf16.msra.mxu0 0
      %727 = vmatpush.bf16.msra.mxu0 0
      %728 = vmatpush.bf16.msra.mxu0 0
      %729 = vmatpush.bf16.msra.mxu0 0
      %730 = vmatpush.bf16.msra.mxu0 0
      %731 = vmatpush.bf16.msra.mxu0 0
      %732 = vmatpush.bf16.msra.mxu0 %v684
      %733 = vmatmul.bf16.gmra.mxu0 %v672
      %v734 = vpop.f32.mrf.mxu0
      %v735 = vadd.f32 0.0, %v734
      %v736 = vpop.f32.mrf.mxu0
      %737 = vdwg.mxu0
      %v738 = vadd.f32 %v650, %v696
      %v739 = vadd.f32 %v651, %v709
      %v740 = vadd.f32 %v652, %v722
      %v741 = vadd.f32 %v653, %v735
      %s742 = scalar_lea.vmem %s2, 20
      %v743 = vld [vmem:[%s742] sm:$0xf]
      %744 = vrot.lane.b32.xlu0 %v317, 108
      %v745 = vpop.permute.xlu0 %744
      %746 = vrot.lane.b32.xlu0 %v318, 108
      %v747 = vpop.permute.xlu0 %746
      %748 = vrot.lane.b32.xlu0 %v319, 108
      %v749 = vpop.permute.xlu0 %748
      %750 = vrot.lane.b32.xlu0 %v320, 108
      %v751 = vpop.permute.xlu0 %750
      %752 = vrot.lane.b32.xlu0 %v323, 108
      %v753 = vpop.permute.xlu0 %752
      %vm754 = vcmask 883712
      %v755 = vsel %vm754, %v745, %v747
      %v756 = vsel %vm754, %v747, %v749
      %v757 = vsel %vm754, %v749, %v751
      %v758 = vsel %vm754, %v751, %v753
      %v760 = vsel %vm342, %v743, 0
      %v763 = vsel %vm346, %v755, 0
      %v766 = vsel %vm346, %v756, 0
      %v769 = vsel %vm346, %v757, 0
      %v772 = vsel %vm346, %v758, 0
      %774 = vmatpush.bf16.msra.mxu0 0
      %775 = vmatpush.bf16.msra.mxu0 0
      %776 = vmatpush.bf16.msra.mxu0 0
      %777 = vmatpush.bf16.msra.mxu0 0
      %778 = vmatpush.bf16.msra.mxu0 0
      %779 = vmatpush.bf16.msra.mxu0 0
      %780 = vmatpush.bf16.msra.mxu0 0
      %781 = vmatpush.bf16.msra.mxu0 %v763
      %782 = vmatmul.bf16.gmra.mxu0 %v760
      %v783 = vpop.f32.mrf.mxu0
      %v784 = vadd.f32 0.0, %v783
      %v785 = vpop.f32.mrf.mxu0
      %786 = vdwg.mxu0
      %787 = vmatpush.bf16.msra.mxu0 0
      %788 = vmatpush.bf16.msra.mxu0 0
      %789 = vmatpush.bf16.msra.mxu0 0
      %790 = vmatpush.bf16.msra.mxu0 0
      %791 = vmatpush.bf16.msra.mxu0 0
      %792 = vmatpush.bf16.msra.mxu0 0
      %793 = vmatpush.bf16.msra.mxu0 0
      %794 = vmatpush.bf16.msra.mxu0 %v766
      %795 = vmatmul.bf16.gmra.mxu0 %v760
      %v796 = vpop.f32.mrf.mxu0
      %v797 = vadd.f32 0.0, %v796
      %v798 = vpop.f32.mrf.mxu0
      %799 = vdwg.mxu0
      %800 = vmatpush.bf16.msra.mxu0 0
      %801 = vmatpush.bf16.msra.mxu0 0
      %802 = vmatpush.bf16.msra.mxu0 0
      %803 = vmatpush.bf16.msra.mxu0 0
      %804 = vmatpush.bf16.msra.mxu0 0
      %805 = vmatpush.bf16.msra.mxu0 0
      %806 = vmatpush.bf16.msra.mxu0 0
      %807 = vmatpush.bf16.msra.mxu0 %v769
      %808 = vmatmul.bf16.gmra.mxu0 %v760
      %v809 = vpop.f32.mrf.mxu0
      %v810 = vadd.f32 0.0, %v809
      %v811 = vpop.f32.mrf.mxu0
      %812 = vdwg.mxu0
      %813 = vmatpush.bf16.msra.mxu0 0
      %814 = vmatpush.bf16.msra.mxu0 0
      %815 = vmatpush.bf16.msra.mxu0 0
      %816 = vmatpush.bf16.msra.mxu0 0
      %817 = vmatpush.bf16.msra.mxu0 0
      %818 = vmatpush.bf16.msra.mxu0 0
      %819 = vmatpush.bf16.msra.mxu0 0
      %820 = vmatpush.bf16.msra.mxu0 %v772
      %821 = vmatmul.bf16.gmra.mxu0 %v760
      %v822 = vpop.f32.mrf.mxu0
      %v823 = vadd.f32 0.0, %v822
      %v824 = vpop.f32.mrf.mxu0
      %825 = vdwg.mxu0
      %v826 = vadd.f32 %v738, %v784
      %v827 = vadd.f32 %v739, %v797
      %v828 = vadd.f32 %v740, %v810
      %v829 = vadd.f32 %v741, %v823
      %s830 = scalar_lea.vmem %s2, 24
      %v831 = vld [vmem:[%s830] sm:$0xf]
      %832 = vrot.lane.b32.xlu0 %v317, 92
      %v833 = vpop.permute.xlu0 %832
      %834 = vrot.lane.b32.xlu0 %v318, 92
      %v835 = vpop.permute.xlu0 %834
      %836 = vrot.lane.b32.xlu0 %v319, 92
      %v837 = vpop.permute.xlu0 %836
      %838 = vrot.lane.b32.xlu0 %v320, 92
      %v839 = vpop.permute.xlu0 %838
      %840 = vrot.lane.b32.xlu0 %v323, 92
      %v841 = vpop.permute.xlu0 %840
      %vm842 = vcmask 752640
      %v843 = vsel %vm842, %v833, %v835
      %v844 = vsel %vm842, %v835, %v837
      %v845 = vsel %vm842, %v837, %v839
      %v846 = vsel %vm842, %v839, %v841
      %v848 = vsel %vm342, %v831, 0
      %v851 = vsel %vm346, %v843, 0
      %v854 = vsel %vm346, %v844, 0
      %v857 = vsel %vm346, %v845, 0
      %v860 = vsel %vm346, %v846, 0
      %862 = vmatpush.bf16.msra.mxu0 0
      %863 = vmatpush.bf16.msra.mxu0 0
      %864 = vmatpush.bf16.msra.mxu0 0
      %865 = vmatpush.bf16.msra.mxu0 0
      %866 = vmatpush.bf16.msra.mxu0 0
      %867 = vmatpush.bf16.msra.mxu0 0
      %868 = vmatpush.bf16.msra.mxu0 0
      %869 = vmatpush.bf16.msra.mxu0 %v851
      %870 = vmatmul.bf16.gmra.mxu0 %v848
      %v871 = vpop.f32.mrf.mxu0
      %v872 = vadd.f32 0.0, %v871
      %v873 = vpop.f32.mrf.mxu0
      %874 = vdwg.mxu0
      %875 = vmatpush.bf16.msra.mxu0 0
      %876 = vmatpush.bf16.msra.mxu0 0
      %877 = vmatpush.bf16.msra.mxu0 0
      %878 = vmatpush.bf16.msra.mxu0 0
      %879 = vmatpush.bf16.msra.mxu0 0
      %880 = vmatpush.bf16.msra.mxu0 0
      %881 = vmatpush.bf16.msra.mxu0 0
      %882 = vmatpush.bf16.msra.mxu0 %v854
      %883 = vmatmul.bf16.gmra.mxu0 %v848
      %v884 = vpop.f32.mrf.mxu0
      %v885 = vadd.f32 0.0, %v884
      %v886 = vpop.f32.mrf.mxu0
      %887 = vdwg.mxu0
      %888 = vmatpush.bf16.msra.mxu0 0
      %889 = vmatpush.bf16.msra.mxu0 0
      %890 = vmatpush.bf16.msra.mxu0 0
      %891 = vmatpush.bf16.msra.mxu0 0
      %892 = vmatpush.bf16.msra.mxu0 0
      %893 = vmatpush.bf16.msra.mxu0 0
      %894 = vmatpush.bf16.msra.mxu0 0
      %895 = vmatpush.bf16.msra.mxu0 %v857
      %896 = vmatmul.bf16.gmra.mxu0 %v848
      %v897 = vpop.f32.mrf.mxu0
      %v898 = vadd.f32 0.0, %v897
      %v899 = vpop.f32.mrf.mxu0
      %900 = vdwg.mxu0
      %901 = vmatpush.bf16.msra.mxu0 0
      %902 = vmatpush.bf16.msra.mxu0 0
      %903 = vmatpush.bf16.msra.mxu0 0
      %904 = vmatpush.bf16.msra.mxu0 0
      %905 = vmatpush.bf16.msra.mxu0 0
      %906 = vmatpush.bf16.msra.mxu0 0
      %907 = vmatpush.bf16.msra.mxu0 0
      %908 = vmatpush.bf16.msra.mxu0 %v860
      %909 = vmatmul.bf16.gmra.mxu0 %v848
      %v910 = vpop.f32.mrf.mxu0
      %v911 = vadd.f32 0.0, %v910
      %v912 = vpop.f32.mrf.mxu0
      %913 = vdwg.mxu0
      %v914 = vadd.f32 %v826, %v872
      %v915 = vadd.f32 %v827, %v885
      %v916 = vadd.f32 %v828, %v898
      %v917 = vadd.f32 %v829, %v911
      %s918 = scalar_lea.vmem %s2, 28
      %v919 = vld [vmem:[%s918] sm:$0xf]
      %920 = vrot.lane.b32.xlu0 %v317, 91
      %v921 = vpop.permute.xlu0 %920
      %922 = vrot.lane.b32.xlu0 %v318, 91
      %v923 = vpop.permute.xlu0 %922
      %924 = vrot.lane.b32.xlu0 %v319, 91
      %v925 = vpop.permute.xlu0 %924
      %926 = vrot.lane.b32.xlu0 %v320, 91
      %v927 = vpop.permute.xlu0 %926
      %928 = vrot.lane.b32.xlu0 %v323, 91
      %v929 = vpop.permute.xlu0 %928
      %vm930 = vcmask 744448
      %v931 = vsel %vm930, %v921, %v923
      %v932 = vsel %vm930, %v923, %v925
      %v933 = vsel %vm930, %v925, %v927
      %v934 = vsel %vm930, %v927, %v929
      %v936 = vsel %vm342, %v919, 0
      %v939 = vsel %vm346, %v931, 0
      %v942 = vsel %vm346, %v932, 0
      %v945 = vsel %vm346, %v933, 0
      %v948 = vsel %vm346, %v934, 0
      %950 = vmatpush.bf16.msra.mxu0 0
      %951 = vmatpush.bf16.msra.mxu0 0
      %952 = vmatpush.bf16.msra.mxu0 0
      %953 = vmatpush.bf16.msra.mxu0 0
      %954 = vmatpush.bf16.msra.mxu0 0
      %955 = vmatpush.bf16.msra.mxu0 0
      %956 = vmatpush.bf16.msra.mxu0 0
      %957 = vmatpush.bf16.msra.mxu0 %v939
      %958 = vmatmul.bf16.gmra.mxu0 %v936
      %v959 = vpop.f32.mrf.mxu0
      %v960 = vadd.f32 0.0, %v959
      %v961 = vpop.f32.mrf.mxu0
      %962 = vdwg.mxu0
      %963 = vmatpush.bf16.msra.mxu0 0
      %964 = vmatpush.bf16.msra.mxu0 0
      %965 = vmatpush.bf16.msra.mxu0 0
      %966 = vmatpush.bf16.msra.mxu0 0
      %967 = vmatpush.bf16.msra.mxu0 0
      %968 = vmatpush.bf16.msra.mxu0 0
      %969 = vmatpush.bf16.msra.mxu0 0
      %970 = vmatpush.bf16.msra.mxu0 %v942
      %971 = vmatmul.bf16.gmra.mxu0 %v936
      %v972 = vpop.f32.mrf.mxu0
      %v973 = vadd.f32 0.0, %v972
      %v974 = vpop.f32.mrf.mxu0
      %975 = vdwg.mxu0
      %976 = vmatpush.bf16.msra.mxu0 0
      %977 = vmatpush.bf16.msra.mxu0 0
      %978 = vmatpush.bf16.msra.mxu0 0
      %979 = vmatpush.bf16.msra.mxu0 0
      %980 = vmatpush.bf16.msra.mxu0 0
      %981 = vmatpush.bf16.msra.mxu0 0
      %982 = vmatpush.bf16.msra.mxu0 0
      %983 = vmatpush.bf16.msra.mxu0 %v945
      %984 = vmatmul.bf16.gmra.mxu0 %v936
      %v985 = vpop.f32.mrf.mxu0
      %v986 = vadd.f32 0.0, %v985
      %v987 = vpop.f32.mrf.mxu0
      %988 = vdwg.mxu0
      %989 = vmatpush.bf16.msra.mxu0 0
      %990 = vmatpush.bf16.msra.mxu0 0
      %991 = vmatpush.bf16.msra.mxu0 0
      %992 = vmatpush.bf16.msra.mxu0 0
      %993 = vmatpush.bf16.msra.mxu0 0
      %994 = vmatpush.bf16.msra.mxu0 0
      %995 = vmatpush.bf16.msra.mxu0 0
      %996 = vmatpush.bf16.msra.mxu0 %v948
      %997 = vmatmul.bf16.gmra.mxu0 %v936
      %v998 = vpop.f32.mrf.mxu0
      %v999 = vadd.f32 0.0, %v998
      %v1000 = vpop.f32.mrf.mxu0
      %1001 = vdwg.mxu0
      %v1002 = vadd.f32 %v914, %v960
      %v1003 = vadd.f32 %v915, %v973
      %v1004 = vadd.f32 %v916, %v986
      %v1005 = vadd.f32 %v917, %v999
      %s1006 = scalar_lea.vmem %s2, 32
      %v1007 = vld [vmem:[%s1006] sm:$0xf]
      %1008 = vrot.lane.b32.xlu0 %v317, 90
      %v1009 = vpop.permute.xlu0 %1008
      %1010 = vrot.lane.b32.xlu0 %v318, 90
      %v1011 = vpop.permute.xlu0 %1010
      %1012 = vrot.lane.b32.xlu0 %v319, 90
      %v1013 = vpop.permute.xlu0 %1012
      %1014 = vrot.lane.b32.xlu0 %v320, 90
      %v1015 = vpop.permute.xlu0 %1014
      %1016 = vrot.lane.b32.xlu0 %v323, 90
      %v1017 = vpop.permute.xlu0 %1016
      %vm1018 = vcmask 736256
      %v1019 = vsel %vm1018, %v1009, %v1011
      %v1020 = vsel %vm1018, %v1011, %v1013
      %v1021 = vsel %vm1018, %v1013, %v1015
      %v1022 = vsel %vm1018, %v1015, %v1017
      %v1024 = vsel %vm342, %v1007, 0
      %v1027 = vsel %vm346, %v1019, 0
      %v1030 = vsel %vm346, %v1020, 0
      %v1033 = vsel %vm346, %v1021, 0
      %v1036 = vsel %vm346, %v1022, 0
      %1038 = vmatpush.bf16.msra.mxu0 0
      %1039 = vmatpush.bf16.msra.mxu0 0
      %1040 = vmatpush.bf16.msra.mxu0 0
      %1041 = vmatpush.bf16.msra.mxu0 0
      %1042 = vmatpush.bf16.msra.mxu0 0
      %1043 = vmatpush.bf16.msra.mxu0 0
      %1044 = vmatpush.bf16.msra.mxu0 0
      %1045 = vmatpush.bf16.msra.mxu0 %v1027
      %1046 = vmatmul.bf16.gmra.mxu0 %v1024
      %v1047 = vpop.f32.mrf.mxu0
      %v1048 = vadd.f32 0.0, %v1047
      %v1049 = vpop.f32.mrf.mxu0
      %1050 = vdwg.mxu0
      %1051 = vmatpush.bf16.msra.mxu0 0
      %1052 = vmatpush.bf16.msra.mxu0 0
      %1053 = vmatpush.bf16.msra.mxu0 0
      %1054 = vmatpush.bf16.msra.mxu0 0
      %1055 = vmatpush.bf16.msra.mxu0 0
      %1056 = vmatpush.bf16.msra.mxu0 0
      %1057 = vmatpush.bf16.msra.mxu0 0
      %1058 = vmatpush.bf16.msra.mxu0 %v1030
      %1059 = vmatmul.bf16.gmra.mxu0 %v1024
      %v1060 = vpop.f32.mrf.mxu0
      %v1061 = vadd.f32 0.0, %v1060
      %v1062 = vpop.f32.mrf.mxu0
      %1063 = vdwg.mxu0
      %1064 = vmatpush.bf16.msra.mxu0 0
      %1065 = vmatpush.bf16.msra.mxu0 0
      %1066 = vmatpush.bf16.msra.mxu0 0
      %1067 = vmatpush.bf16.msra.mxu0 0
      %1068 = vmatpush.bf16.msra.mxu0 0
      %1069 = vmatpush.bf16.msra.mxu0 0
      %1070 = vmatpush.bf16.msra.mxu0 0
      %1071 = vmatpush.bf16.msra.mxu0 %v1033
      %1072 = vmatmul.bf16.gmra.mxu0 %v1024
      %v1073 = vpop.f32.mrf.mxu0
      %v1074 = vadd.f32 0.0, %v1073
      %v1075 = vpop.f32.mrf.mxu0
      %1076 = vdwg.mxu0
      %1077 = vmatpush.bf16.msra.mxu0 0
      %1078 = vmatpush.bf16.msra.mxu0 0
      %1079 = vmatpush.bf16.msra.mxu0 0
      %1080 = vmatpush.bf16.msra.mxu0 0
      %1081 = vmatpush.bf16.msra.mxu0 0
      %1082 = vmatpush.bf16.msra.mxu0 0
      %1083 = vmatpush.bf16.msra.mxu0 0
      %1084 = vmatpush.bf16.msra.mxu0 %v1036
      %1085 = vmatmul.bf16.gmra.mxu0 %v1024
      %v1086 = vpop.f32.mrf.mxu0
      %v1087 = vadd.f32 0.0, %v1086
      %v1088 = vpop.f32.mrf.mxu0
      %1089 = vdwg.mxu0
      %v1090 = vadd.f32 %v1002, %v1048
      %v1091 = vadd.f32 %v1003, %v1061
      %v1092 = vadd.f32 %v1004, %v1074
      %v1093 = vadd.f32 %v1005, %v1087
      %v1094 = vld [vmem:[%s3] sm:$0xff]
      %1096 = vset.pattern.permute.xlu0 0
      %1097 = vperm.xlu0 %1096, %v1094
      %v1098 = vpop.permute.xlu0 %1097
      %v1100 = vmul.f32 %v1090, %v1098
      %v1101 = vmul.f32 %v1091, %v1098
      %v1102 = vmul.f32 %v1092, %v1098
      %v1103 = vmul.f32 %v1093, %v1098
      %v1104 = vld [vmem:[%s4] sm:$0xff]
      %1106 = vset.pattern.permute.xlu0 0
      %1107 = vperm.xlu0 %1106, %v1104
      %v1108 = vpop.permute.xlu0 %1107
      %v1110 = vadd.f32 %v1100, %v1108
      %v1111 = vadd.f32 %v1101, %v1108
      %v1112 = vadd.f32 %v1102, %v1108
      %v1113 = vadd.f32 %v1103, %v1108
      %vm1114 = vcmp.gt.f32.partialorder %v1110, 0.0
      %vm1115 = vcmp.gt.f32.partialorder %v1111, 0.0
      %vm1116 = vcmp.gt.f32.partialorder %v1112, 0.0
      %vm1117 = vcmp.gt.f32.partialorder %v1113, 0.0
      %v1118 = vmul.f32 %v1110, 0.01
      %v1119 = vmul.f32 %v1111, 0.01
      %v1120 = vmul.f32 %v1112, 0.01
      %v1121 = vmul.f32 %v1113, 0.01
      %v1122 = vsel %vm1114, %v1110, %v1118
      %v1123 = vsel %vm1115, %v1111, %v1119
      %v1124 = vsel %vm1116, %v1112, %v1120
      %v1125 = vsel %vm1117, %v1113, %v1121
      %1126 = vst [vmem:[%s305] sm:$0xff] %v1122
      %1127 = vst [vmem:[%s305 + $0x8] sm:$0xff] %v1123
      %1128 = vst [vmem:[%s305 + $0x10] sm:$0xff] %v1124
      %1129 = vst [vmem:[%s305 + $0x18] sm:$0xff] %v1125
      %s1130 = smul.u32 4, %s21
      %p1131 = scmp.lt.s32.totalorder %s20, 1
      %s1132 = scalar_select %p1131, %s20, 1
      %p1133 = scmp.lt.s32.totalorder %s1130, 3
      %s1134 = scalar_select %p1133, %s1130, 3
      %s1135 = smul.addr %s1132, 4
      %s1136 = sadd.s32 %s1134, %s1135
      %s1137 = smul.addr %s1136, 8
      %s1138 = scalar_lea.vmem %s5, %s1137
      // Predicated region
      $region41: #{conv_bn_lrelu.1} parent=39 // pred_check
        %p1139 = pneg %p169
      $region42: #{conv_bn_lrelu.1} parent=39 // pred_check_branch
        %1141 = sbr.rel (%p1139) target = $region44
      $region43: #{conv_bn_lrelu.1} parent=39 // pred_region
        %s1142 = smul.u32 4, %s21
      $region44: #{conv_bn_lrelu.1} parent=39 // pred_fallthru
        _
    $region40: #{conv_bn_lrelu.1} parent=5 // pred_fallthru
      _
    %p1143 = scmp.le.s32.totalorder 2, %s11
    // Predicated region
    $region45: #{conv_bn_lrelu.1} parent=5 // pred_check
      %p1144 = pneg %p1143
    $region46: #{conv_bn_lrelu.1} parent=5 // pred_check_branch
      %1146 = sbr.rel (%p1144) target = $region48
    $region47: #{conv_bn_lrelu.1} parent=5 // pred_region
      %s1147 = ssub.s32 %s11, 2
      // Predicated region
      $region49: #{conv_bn_lrelu.1} parent=47 // pred_check
        %p1148 = pneg %p175
      $region50: #{conv_bn_lrelu.1} parent=47 // pred_check_branch
        %1150 = sbr.rel (%p1148) target = $region52
      $region51: #{conv_bn_lrelu.1} parent=47 // pred_region
        %s1151 = smul.u32 4, %s23
        %p1152 = scmp.lt.s32.totalorder %s22, 1
        %s1153 = scalar_select %p1152, %s22, 1
        %p1154 = scmp.lt.s32.totalorder %s1151, 3
        %s1155 = scalar_select %p1154, %s1151, 3
        %s1156 = smul.addr %s1153, 4
        %s1157 = sadd.s32 %s1155, %s1156
        %s1158 = smul.addr %s1157, 8
        %s1159 = scalar_lea.vmem %s5, %s1158
      $region52: #{conv_bn_lrelu.1} parent=47 // pred_fallthru
        _
    $region48: #{conv_bn_lrelu.1} parent=5 // pred_fallthru
      _
  $region6: #{conv_bn_lrelu.1} parent=0 // loop_footer
    %s15 = sadd.s32 1, %s11
  $region7: #{conv_bn_lrelu.1} parent=0 // loop_footer_branch
    %10 = sbr.rel target = $region3
  $region8: #{conv_bn_lrelu.1} parent=0 // loop_exit
    _

</llo_original>
